<compile_context>
chip_gen: v7x
topology: tpu7x:2x2x1
jax: 0.10.0
libtpu: 0.0.40
codegen_flags: <defaults>
</compile_context>

<pallas_src>
import jax
import jax.numpy as jnp
from jax.experimental import pallas as pl
from jax.experimental.pallas import tpu as pltpu


def _round_up(n, m):
    return ((n + m - 1) // m) * m


# -----------------------------------------------------------------------------
# Pallas kernel:  out = x @ A^T + u @ B^T   (two accumulating MXU dots)
#   x_ref : (bm, Nk)   u_ref : (bm, Ud)
#   wa_ref: (Nk, Nk)   wb_ref: (Ud, Nk)     (resident in VMEM across steps)
#   o_ref : (bm, Nk)
# -----------------------------------------------------------------------------
def _koopman_kernel(x_ref, u_ref, wa_ref, wb_ref, o_ref):
    acc = jnp.dot(x_ref[...], wa_ref[...], preferred_element_type=jnp.float32)
    acc = acc + jnp.dot(u_ref[...], wb_ref[...], preferred_element_type=jnp.float32)
    o_ref[...] = acc.astype(o_ref.dtype)


# -----------------------------------------------------------------------------
# One-time weight preparation (hoisted out of the per-call path).
#   A : (Nk, Nk)  lA.weight      B : (Nk, Ud)  lB.weight
# Returns (A^T, B^T) — no padding needed.
# -----------------------------------------------------------------------------
def prepare_weights(A, B):
    return jnp.asarray(A).T, jnp.asarray(B).T


# -----------------------------------------------------------------------------
# Batch tiling: pad batch to a multiple of 8 only, then split into tiles of at
# most `cap` rows, with >=2 tiles (when batch >= 16) so the parallel axis can
# shard across the two TensorCores on v7x.
# -----------------------------------------------------------------------------
def _choose_batch_tiling(Bsz, cap=4096):
    Bp8 = _round_up(max(Bsz, 1), 8)
    nt = max(pl.cdiv(Bp8, cap), 1)
    if Bp8 >= 16 and nt < 2:
        nt = 2
    bm = _round_up(pl.cdiv(Bp8, nt), 8)
    Bp = bm * nt
    return bm, Bp, nt


# -----------------------------------------------------------------------------
# Forward wrapper.  x:(B,Nk), u:(B,Ud), (wa, wb) from prepare_weights.
# -----------------------------------------------------------------------------
@jax.jit
def koopman_forward(x, u, wa, wb):
    Bsz, Nk = x.shape
    Ud = u.shape[1]
    assert wa.shape == (Nk, Nk) and wb.shape == (Ud, Nk)

    bm, Bp, nt = _choose_batch_tiling(Bsz)

    # Only batch-row padding, only when needed (<= 8*nt extra rows).
    if Bp != Bsz:
        x = jnp.pad(x, ((0, Bp - Bsz), (0, 0)))
        u = jnp.pad(u, ((0, Bp - Bsz), (0, 0)))

    out = pl.pallas_call(
        _koopman_kernel,
        out_shape=jax.ShapeDtypeStruct((Bp, Nk), x.dtype),
        grid_spec=pltpu.PrefetchScalarGridSpec(
            num_scalar_prefetch=0,
            grid=(nt,),
            in_specs=[
                pl.BlockSpec((bm, Nk), lambda i: (i, 0)),   # x tiles (pipelined)
                pl.BlockSpec((bm, Ud), lambda i: (i, 0)),   # u tiles (pipelined)
                pl.BlockSpec((Nk, Nk), lambda i: (0, 0)),   # A^T resident
                pl.BlockSpec((Ud, Nk), lambda i: (0, 0)),   # B^T resident
            ],
            out_specs=pl.BlockSpec((bm, Nk), lambda i: (i, 0)),
        ),
        compiler_params=pltpu.CompilerParams(
            dimension_semantics=("parallel",),              # batch axis shards TCs
        ),
        cost_estimate=pl.CostEstimate(
            flops=2 * Bp * (Nk + Ud) * Nk,
            transcendentals=0,
            bytes_accessed=4 * (Bp * (Nk + Ud) + (Nk + Ud) * Nk + Bp * Nk),
        ),
    )(x, u, wa, wb)

    if Bp != Bsz:
        out = out[:Bsz]
    return out


# -----------------------------------------------------------------------------
# Deterministic parameter construction (mirrors Network.__init__)
# -----------------------------------------------------------------------------
def init_params(key, encode_layers, Nkoopman, u_dim):
    params = {}
    keys = jax.random.split(key, len(encode_layers) + 2)

    # encode_net Linear layers (unused by forward(), built for fidelity)
    enc = []
    for layer_i in range(len(encode_layers) - 1):
        fan_in, fan_out = encode_layers[layer_i], encode_layers[layer_i + 1]
        bound = 1.0 / jnp.sqrt(fan_in)
        wk, bk = jax.random.split(keys[layer_i])
        W = jax.random.uniform(wk, (fan_out, fan_in), jnp.float32, -bound, bound)
        b = jax.random.uniform(bk, (fan_out,), jnp.float32, -bound, bound)
        enc.append((W, b))
    params["encode_net"] = enc

    # lA: gaussian_init_(Nkoopman, std=1) -> N(0, (1/Nkoopman)^2), then
    # project to (scaled) orthogonal via SVD:  A = U V^T * 0.9
    A0 = jax.random.normal(keys[-2], (Nkoopman, Nkoopman), jnp.float32) / Nkoopman
    U, _, Vt = jnp.linalg.svd(A0, full_matrices=False)
    params["lA"] = (U @ Vt) * 0.9  # (Nkoopman, Nkoopman)

    # lB: default nn.Linear init, weight shape (Nkoopman, u_dim)
    bound = 1.0 / jnp.sqrt(u_dim)
    params["lB"] = jax.random.uniform(
        keys[-1], (Nkoopman, u_dim), jnp.float32, -bound, bound
    )
    return params


# -----------------------------------------------------------------------------
if __name__ == "__main__":
    # Shapes consistent with the module; batch big enough to exercise the
    # 2-tile grid but still small.
    batch = 256
    state_dim = 8
    encode_layers = [state_dim, 32, 24]          # encoder output dim = 24
    Nkoopman = state_dim + encode_layers[-1]     # 32 (state concat encoding)
    u_dim = 4

    key = jax.random.PRNGKey(0)
    pkey, xkey, ukey = jax.random.split(key, 3)
    params = init_params(pkey, encode_layers, Nkoopman, u_dim)

    x = jax.random.normal(xkey, (batch, Nkoopman), jnp.float32)
    u = jax.random.normal(ukey, (batch, u_dim), jnp.float32)

    # Weight transposes are done ONCE, outside the per-call path.
    wa, wb = prepare_weights(params["lA"], params["lB"])
    wa = jax.block_until_ready(wa)
    wb = jax.block_until_ready(wb)

    out = koopman_forward(x, u, wa, wb)
    out = jax.block_until_ready(out)

    # Reference check (plain JAX) for sanity.
    ref = x @ params["lA"].T + u @ params["lB"].T
    assert out.shape == (batch, Nkoopman)
    assert jnp.allclose(out, ref, atol=1e-5, rtol=1e-5)

    print("KERNEL_OK")
</pallas_src>

<mosaic_0001>
module attributes {stable_mosaic.version = 11 : i64} {
  func.func @_koopman_kernel(%arg0: i32, %arg1: memref<128x32xf32, #tpu.memory_space<vmem>>, %arg2: memref<128x4xf32, #tpu.memory_space<vmem>>, %arg3: memref<32x32xf32, #tpu.memory_space<vmem>>, %arg4: memref<4x32xf32, #tpu.memory_space<vmem>>, %arg5: memref<128x32xf32, #tpu.memory_space<vmem>>) attributes {dimension_semantics = [#tpu.dimension_semantics<parallel>], iteration_bounds = array<i64: 2>, scalar_prefetch = 0 : i64, scratch_operands = 0 : i64, tpu.core_type = #tpu.core_type<tc>, window_params = [{transform_indices = @transform_0, window_bounds = array<i64: 128, 32>}, {transform_indices = @transform_1, window_bounds = array<i64: 128, 4>}, {pipeline_mode = #tpu.pipeline_mode<synchronous>, transform_indices = @transform_2, window_bounds = array<i64: 32, 32>}, {pipeline_mode = #tpu.pipeline_mode<synchronous>, transform_indices = @transform_3, window_bounds = array<i64: 4, 32>}, {transform_indices = @transform_4, window_bounds = array<i64: 128, 32>}]} {
    %c0 = arith.constant 0 : index
    %c0_0 = arith.constant 0 : index
    %0 = vector.load %arg1[%c0, %c0_0] : memref<128x32xf32, #tpu.memory_space<vmem>>, vector<128x32xf32>
    %c0_1 = arith.constant 0 : index
    %c0_2 = arith.constant 0 : index
    %1 = vector.load %arg3[%c0_1, %c0_2] : memref<32x32xf32, #tpu.memory_space<vmem>>, vector<32x32xf32>
    %cst = arith.constant dense<0.000000e+00> : vector<128x32xf32>
    %2 = tpu.matmul %0, %1, %cst {dimension_numbers = #tpu.dot_dimension_numbers<[1], [0], [0], [1], [0, 0, 1, 1], [], []>} : vector<128x32xf32>, vector<32x32xf32>, vector<128x32xf32> -> vector<128x32xf32>
    %c0_3 = arith.constant 0 : index
    %c0_4 = arith.constant 0 : index
    %3 = vector.load %arg2[%c0_3, %c0_4] : memref<128x4xf32, #tpu.memory_space<vmem>>, vector<128x4xf32>
    %c0_5 = arith.constant 0 : index
    %c0_6 = arith.constant 0 : index
    %4 = vector.load %arg4[%c0_5, %c0_6] : memref<4x32xf32, #tpu.memory_space<vmem>>, vector<4x32xf32>
    %cst_7 = arith.constant dense<0.000000e+00> : vector<128x32xf32>
    %5 = tpu.matmul %3, %4, %cst_7 {dimension_numbers = #tpu.dot_dimension_numbers<[1], [0], [0], [1], [0, 0, 1, 1], [], []>} : vector<128x4xf32>, vector<4x32xf32>, vector<128x32xf32> -> vector<128x32xf32>
    %6 = arith.addf %2, %5 : vector<128x32xf32>
    %c0_8 = arith.constant 0 : index
    %c0_9 = arith.constant 0 : index
    %7 = vector.load %arg5[%c0_8, %c0_9] : memref<128x32xf32, #tpu.memory_space<vmem>>, vector<128x32xf32>
    tpu.vector_store %arg5[%c0_8, %c0_9], %6 {strides = array<i32>} : memref<128x32xf32, #tpu.memory_space<vmem>>, vector<128x32xf32>,
    return
  }
  func.func @transform_0(%arg0: i32) -> (i32, i32) {
    %c0_i32 = arith.constant 0 : i32
    %c0_i32_0 = arith.constant 0 : i32
    return %arg0, %c0_i32 : i32, i32
  }
  func.func @transform_1(%arg0: i32) -> (i32, i32) {
    %c0_i32 = arith.constant 0 : i32
    %c0_i32_0 = arith.constant 0 : i32
    return %arg0, %c0_i32 : i32, i32
  }
  func.func @transform_2(%arg0: i32) -> (i32, i32) {
    %c0_i32 = arith.constant 0 : i32
    %c0_i32_0 = arith.constant 0 : i32
    %c0_i32_1 = arith.constant 0 : i32
    return %c0_i32, %c0_i32_0 : i32, i32
  }
  func.func @transform_3(%arg0: i32) -> (i32, i32) {
    %c0_i32 = arith.constant 0 : i32
    %c0_i32_0 = arith.constant 0 : i32
    %c0_i32_1 = arith.constant 0 : i32
    return %c0_i32, %c0_i32_0 : i32, i32
  }
  func.func @transform_4(%arg0: i32) -> (i32, i32) {
    %c0_i32 = arith.constant 0 : i32
    %c0_i32_0 = arith.constant 0 : i32
    return %arg0, %c0_i32 : i32, i32
  }
}

</mosaic_0001>

<llo_original>
// kernel: koopman_forward.1
$region0: #{koopman_forward.1}
  #allocation0 [shape = 'u32[]', space=smem, size = 0x4, offset = 0x4, fixed_abs, tag = 'smem constant byte address 0x4 - core index']
  #allocation1 [shape = 'u32[144,128]{1,0:T(1,128)}', space=vmem, size = 0x12000, scoped, tag = 'internal scratch']
  %s0 = inlined_call_operand.vmem [shape: f32[256,32], index: 0, kind: input, shape index: {}]
  %s1 = inlined_call_operand.vmem [shape: f32[256,4], index: 1, kind: input, shape index: {}]
  %s2 = inlined_call_operand.vmem [shape: f32[32,32], index: 2, kind: input, shape index: {}]
  %s3 = inlined_call_operand.vmem [shape: f32[4,32], index: 3, kind: input, shape index: {}]
  %s4 = inlined_call_operand.vmem [shape: f32[256,32], index: 4, kind: output, shape index: {}]
  %s5 = sld [smem:[#allocation0]]
  $region49: #{koopman_forward.1} parent=0
    _
  %s7 = ssub.s32 1, %s5
  %s8 = scalar_select 0, %s7, %s5
  loop: start=0, step=1, limit=4
  $region2: #{koopman_forward.1} parent=0 // loop_pre_header
    _
  $region3: #{koopman_forward.1} parent=0 // loop_header
    %s10 = sphi 0, %s14
    %p11 = scmp.ge.s32.totalorder %s10, 4
    %s20 = sphi 0, %s22
    %s23 = sphi 0, %s20
    %s24 = sphi 0, %s23
    %s40 = sphi 0, %s24
    %s46 = sphi 0, %s48
    %s49 = sphi 0, %s46
    %s50 = sphi 0, %s49
    %s66 = sphi 0, %s50
    %s70 = sphi 0, %s70
    %s72 = sphi 0, %s70
    %s73 = sphi 0, %s72
    %s87 = sphi 0, %s73
    %s91 = sphi 0, %s91
    %s93 = sphi 0, %s91
    %s94 = sphi 0, %s93
    %s108 = sphi 0, %s94
    %s114 = sphi 0, %s116
    %s117 = sphi 0, %s114
    %s118 = sphi 0, %s117
    %s134 = sphi 0, %s118
  $region4: #{koopman_forward.1} parent=0 // loop_header_branch
    %13 = sbr.rel (%p11) target = $region8
  $region5: #{koopman_forward.1} parent=0 // loop_body
    %s15 = ssub.s32 %s10, 1
    %s16 = ssub.s32 %s10, 2
    %s17 = sadd.s32 %s10, 1
    %s18 = ssub.s32 %s10, %s17
    %p19 = scmp.eq.s32.totalorder %s18, 0
    %s21 = sadd.s32 %s20, 1
    %s22 = scalar_select %p19, %s20, %s21
    %p25 = pneg %p19
    %p26 = scmp.eq.s32.totalorder %s10, 1
    %p27 = por %p25, %p26
    %p28 = scmp.ne.s32.totalorder %s20, %s23
    %p29 = scmp.eq.s32.totalorder %s10, 0
    %p30 = por %p28, %p29
    %p31 = scmp.ne.s32.totalorder %s20, %s23
    %p32 = scmp.eq.s32.totalorder %s15, 1
    %p33 = por %p31, %p32
    %p34 = scmp.ne.s32.totalorder %s23, %s24
    %p35 = scmp.eq.s32.totalorder %s15, 0
    %p36 = por %p34, %p35
    %p37 = scmp.ne.s32.totalorder %s23, %s24
    %p38 = scmp.eq.s32.totalorder %s16, 1
    %p39 = por %p37, %p38
    %p41 = scmp.ne.s32.totalorder %s24, %s40
    %p42 = scmp.eq.s32.totalorder %s16, 0
    %p43 = por %p41, %p42
    %s44 = ssub.s32 %s10, %s17
    %p45 = scmp.eq.s32.totalorder %s44, 0
    %s47 = sadd.s32 %s46, 1
    %s48 = scalar_select %p45, %s46, %s47
    %p51 = pneg %p45
    %p52 = scmp.eq.s32.totalorder %s10, 1
    %p53 = por %p51, %p52
    %p54 = scmp.ne.s32.totalorder %s46, %s49
    %p55 = scmp.eq.s32.totalorder %s10, 0
    %p56 = por %p54, %p55
    %p57 = scmp.ne.s32.totalorder %s46, %s49
    %p58 = scmp.eq.s32.totalorder %s15, 1
    %p59 = por %p57, %p58
    %p60 = scmp.ne.s32.totalorder %s49, %s50
    %p61 = scmp.eq.s32.totalorder %s15, 0
    %p62 = por %p60, %p61
    %p63 = scmp.ne.s32.totalorder %s49, %s50
    %p64 = scmp.eq.s32.totalorder %s16, 1
    %p65 = por %p63, %p64
    %p67 = scmp.ne.s32.totalorder %s50, %s66
    %p68 = scmp.eq.s32.totalorder %s16, 0
    %p69 = por %p67, %p68
    %s71 = sadd.s32 %s70, 1
    %p74 = scmp.eq.s32.totalorder %s10, 1
    %p75 = scmp.ne.s32.totalorder %s70, %s72
    %p76 = scmp.eq.s32.totalorder %s10, 0
    %p77 = por %p75, %p76
    %p78 = scmp.ne.s32.totalorder %s70, %s72
    %p79 = scmp.eq.s32.totalorder %s15, 1
    %p80 = por %p78, %p79
    %p81 = scmp.ne.s32.totalorder %s72, %s73
    %p82 = scmp.eq.s32.totalorder %s15, 0
    %p83 = por %p81, %p82
    %p84 = scmp.ne.s32.totalorder %s72, %s73
    %p85 = scmp.eq.s32.totalorder %s16, 1
    %p86 = por %p84, %p85
    %p88 = scmp.ne.s32.totalorder %s73, %s87
    %p89 = scmp.eq.s32.totalorder %s16, 0
    %p90 = por %p88, %p89
    %s92 = sadd.s32 %s91, 1
    %p95 = scmp.eq.s32.totalorder %s10, 1
    %p96 = scmp.ne.s32.totalorder %s91, %s93
    %p97 = scmp.eq.s32.totalorder %s10, 0
    %p98 = por %p96, %p97
    %p99 = scmp.ne.s32.totalorder %s91, %s93
    %p100 = scmp.eq.s32.totalorder %s15, 1
    %p101 = por %p99, %p100
    %p102 = scmp.ne.s32.totalorder %s93, %s94
    %p103 = scmp.eq.s32.totalorder %s15, 0
    %p104 = por %p102, %p103
    %p105 = scmp.ne.s32.totalorder %s93, %s94
    %p106 = scmp.eq.s32.totalorder %s16, 1
    %p107 = por %p105, %p106
    %p109 = scmp.ne.s32.totalorder %s94, %s108
    %p110 = scmp.eq.s32.totalorder %s16, 0
    %p111 = por %p109, %p110
    %s112 = ssub.s32 %s10, %s17
    %p113 = scmp.eq.s32.totalorder %s112, 0
    %s115 = sadd.s32 %s114, 1
    %s116 = scalar_select %p113, %s114, %s115
    %p119 = pneg %p113
    %p120 = scmp.eq.s32.totalorder %s10, 1
    %p121 = por %p119, %p120
    %p122 = scmp.ne.s32.totalorder %s114, %s117
    %p123 = scmp.eq.s32.totalorder %s10, 0
    %p124 = por %p122, %p123
    %p125 = scmp.ne.s32.totalorder %s114, %s117
    %p126 = scmp.eq.s32.totalorder %s15, 1
    %p127 = por %p125, %p126
    %p128 = scmp.ne.s32.totalorder %s117, %s118
    %p129 = scmp.eq.s32.totalorder %s15, 0
    %p130 = por %p128, %p129
    %p131 = scmp.ne.s32.totalorder %s117, %s118
    %p132 = scmp.eq.s32.totalorder %s16, 1
    %p133 = por %p131, %p132
    %p135 = scmp.ne.s32.totalorder %s118, %s134
    %p136 = scmp.eq.s32.totalorder %s16, 0
    %p137 = por %p135, %p136
    %p138 = scmp.le.s32.totalorder 1, %s10
    %p139 = scmp.lt.s32.totalorder %s10, 3
    %p140 = pnand %p138, %p139
    %p141 = pneg %p140
    // Predicated region
    $region9: #{koopman_forward.1} parent=5 // pred_check
      _
    $region10: #{koopman_forward.1} parent=5 // pred_check_branch
      %143 = sbr.rel (%p140) target = $region12
    $region11: #{koopman_forward.1} parent=5 // pred_region
      %s144 = ssub.s32 %s10, 1
      // Predicated region
      $region13: #{koopman_forward.1} parent=11 // pred_check
        %p145 = pneg %p83
      $region14: #{koopman_forward.1} parent=11 // pred_check_branch
        %147 = sbr.rel (%p145) target = $region16
      $region15: #{koopman_forward.1} parent=11 // pred_region
        _
      $region16: #{koopman_forward.1} parent=11 // pred_fallthru
        _
      // Predicated region
      $region17: #{koopman_forward.1} parent=11 // pred_check
        %p148 = pneg %p104
      $region18: #{koopman_forward.1} parent=11 // pred_check_branch
        %150 = sbr.rel (%p148) target = $region20
      $region19: #{koopman_forward.1} parent=11 // pred_region
        _
      $region20: #{koopman_forward.1} parent=11 // pred_fallthru
        _
    $region12: #{koopman_forward.1} parent=5 // pred_fallthru
      _
    %p151 = scmp.lt.s32.totalorder %s10, 2
    // Predicated region
    $region21: #{koopman_forward.1} parent=5 // pred_check
      %p152 = pneg %p151
    $region22: #{koopman_forward.1} parent=5 // pred_check_branch
      %154 = sbr.rel (%p152) target = $region24
    $region23: #{koopman_forward.1} parent=5 // pred_region
      // Predicated region
      $region25: #{koopman_forward.1} parent=23 // pred_check
        %p155 = pneg %p30
      $region26: #{koopman_forward.1} parent=23 // pred_check_branch
        %157 = sbr.rel (%p155) target = $region28
      $region27: #{koopman_forward.1} parent=23 // pred_region
        %s158 = smul.u32 16, %s10
        %p159 = scmp.lt.s32.totalorder %s158, 31
        %s160 = scalar_select %p159, %s158, 31
        %s161 = smul.addr %s160, 8
        %s162 = scalar_lea.vmem %s0, %s161
        %s163 = smul.u32 16, %s10
      $region28: #{koopman_forward.1} parent=23 // pred_fallthru
        _
      // Predicated region
      $region29: #{koopman_forward.1} parent=23 // pred_check
        %p164 = pneg %p56
      $region30: #{koopman_forward.1} parent=23 // pred_check_branch
        %166 = sbr.rel (%p164) target = $region32
      $region31: #{koopman_forward.1} parent=23 // pred_region
        %s167 = smul.u32 16, %s10
        %p168 = scmp.lt.s32.totalorder %s167, 31
        %s169 = scalar_select %p168, %s167, 31
        %s170 = smul.addr %s169, 8
        %s171 = scalar_lea.vmem %s1, %s170
        %s172 = smul.u32 16, %s10
      $region32: #{koopman_forward.1} parent=23 // pred_fallthru
        _
    $region24: #{koopman_forward.1} parent=5 // pred_fallthru
      _
    %p173 = scmp.le.s32.totalorder 1, %s10
    %p174 = scmp.lt.s32.totalorder %s10, 3
    %p175 = pnand %p173, %p174
    %p176 = pneg %p175
    // Predicated region
    $region33: #{koopman_forward.1} parent=5 // pred_check
      _
    $region34: #{koopman_forward.1} parent=5 // pred_check_branch
      %178 = sbr.rel (%p175) target = $region36
    $region35: #{koopman_forward.1} parent=5 // pred_region
      %s179 = ssub.s32 %s10, 1
      %s180 = smul.u32 16, %s15
      %p181 = scmp.lt.s32.totalorder %s180, 31
      %s182 = scalar_select %p181, %s180, 31
      %s183 = smul.addr %s182, 8
      %s184 = scalar_lea.vmem %s0, %s183
      %p185 = pneg %p36
      %p186 = pneg %p33
      %s187 = smul.u32 16, %s15
      %p188 = scmp.lt.s32.totalorder %s187, 31
      %s189 = scalar_select %p188, %s187, 31
      %s190 = smul.addr %s189, 8
      %s191 = scalar_lea.vmem %s1, %s190
      %p192 = pneg %p62
      %p193 = pneg %p59
      %p194 = pneg %p83
      %p195 = pneg %p80
      %p196 = pneg %p104
      %p197 = pneg %p101
      %p198 = pneg %p130
      %p199 = pneg %p127
      %s200 = smul.u32 16, %s15
      %p201 = scmp.lt.s32.totalorder %s200, 31
      %s202 = scalar_select %p201, %s200, 31
      %s203 = smul.addr %s202, 8
      %s204 = scalar_lea.vmem %s4, %s203
      %s205 = smul.u32 16, %s15
      %p206 = scmp.lt.s32.totalorder %s205, 31
      %s207 = scalar_select %p206, %s205, 31
      %s208 = smul.addr %s207, 8
      %s209 = scalar_lea.vmem %s0, %s208
      %s210 = smul.u32 16, %s15
      %s211 = smul.u32 16, %s15
      %p212 = scmp.lt.s32.totalorder %s211, 31
      %s213 = scalar_select %p212, %s211, 31
      %s214 = smul.addr %s213, 8
      %s215 = scalar_lea.vmem %s1, %s214
      %s216 = smul.u32 16, %s15
      %s217 = smul.u32 16, %s15
      %p218 = scmp.lt.s32.totalorder %s217, 31
      %s219 = scalar_select %p218, %s217, 31
      %s220 = smul.addr %s219, 8
      %s221 = scalar_lea.vmem %s4, %s220
      %s222 = smul.u32 16, %s15
      %v223 = vld [vmem:[%s209] sm:$0xff]
      %v224 = vld [vmem:[%s209 + $0x8] sm:$0xff]
      %v225 = vld [vmem:[%s209 + $0x10] sm:$0xff]
      %v226 = vld [vmem:[%s209 + $0x18] sm:$0xff]
      %v227 = vld [vmem:[%s209 + $0x20] sm:$0xff]
      %v228 = vld [vmem:[%s209 + $0x28] sm:$0xff]
      %v229 = vld [vmem:[%s209 + $0x30] sm:$0xff]
      %v230 = vld [vmem:[%s209 + $0x38] sm:$0xff]
      %v231 = vld [vmem:[%s209 + $0x40] sm:$0xff]
      %v232 = vld [vmem:[%s209 + $0x48] sm:$0xff]
      %v233 = vld [vmem:[%s209 + $0x50] sm:$0xff]
      %v234 = vld [vmem:[%s209 + $0x58] sm:$0xff]
      %v235 = vld [vmem:[%s209 + $0x60] sm:$0xff]
      %v236 = vld [vmem:[%s209 + $0x68] sm:$0xff]
      %v237 = vld [vmem:[%s209 + $0x70] sm:$0xff]
      %v238 = vld [vmem:[%s209 + $0x78] sm:$0xff]
      %v239 = vld [vmem:[%s2] sm:$0xff]
      %v240 = vld [vmem:[%s2 + $0x8] sm:$0xff]
      %v241 = vld [vmem:[%s2 + $0x10] sm:$0xff]
      %v242 = vld [vmem:[%s2 + $0x18] sm:$0xff]
      %v243 = vld [vmem:[%s215] sm:$0xff]
      %v244 = vld [vmem:[%s215 + $0x8] sm:$0xff]
      %v245 = vld [vmem:[%s215 + $0x10] sm:$0xff]
      %v246 = vld [vmem:[%s215 + $0x18] sm:$0xff]
      %v247 = vld [vmem:[%s215 + $0x20] sm:$0xff]
      %v248 = vld [vmem:[%s215 + $0x28] sm:$0xff]
      %v249 = vld [vmem:[%s215 + $0x30] sm:$0xff]
      %v250 = vld [vmem:[%s215 + $0x38] sm:$0xff]
      %v251 = vld [vmem:[%s215 + $0x40] sm:$0xff]
      %v252 = vld [vmem:[%s215 + $0x48] sm:$0xff]
      %v253 = vld [vmem:[%s215 + $0x50] sm:$0xff]
      %v254 = vld [vmem:[%s215 + $0x58] sm:$0xff]
      %v255 = vld [vmem:[%s215 + $0x60] sm:$0xff]
      %v256 = vld [vmem:[%s215 + $0x68] sm:$0xff]
      %v257 = vld [vmem:[%s215 + $0x70] sm:$0xff]
      %v258 = vld [vmem:[%s215 + $0x78] sm:$0xff]
      %v259 = vld [vmem:[%s3] sm:$0xf]
      %vm260 = vcmask 31744
      %v262 = vsel %vm260, %v243, 0
      %v265 = vsel %vm260, %v244, 0
      %v268 = vsel %vm260, %v245, 0
      %v271 = vsel %vm260, %v246, 0
      %v274 = vsel %vm260, %v247, 0
      %v277 = vsel %vm260, %v248, 0
      %v280 = vsel %vm260, %v249, 0
      %v283 = vsel %vm260, %v250, 0
      %v286 = vsel %vm260, %v251, 0
      %v289 = vsel %vm260, %v252, 0
      %v292 = vsel %vm260, %v253, 0
      %v295 = vsel %vm260, %v254, 0
      %v298 = vsel %vm260, %v255, 0
      %v301 = vsel %vm260, %v256, 0
      %v304 = vsel %vm260, %v257, 0
      %v307 = vsel %vm260, %v258, 0
      %vm309 = vcmask 1043456
      %v311 = vsel %vm309, %v259, 0
      %313 = vmatprep.subr.mxu0 0.0
      %314 = vmatpush1.msra.mxu0 %v311
      %315 = vmatprep.subr.mxu0 0.0
      %316 = vmatpush1.msra.mxu0 0.0
      %317 = vmatprep.subr.mxu0 0.0
      %318 = vmatpush1.msra.mxu0 0.0
      %319 = vmatprep.subr.mxu0 0.0
      %320 = vmatpush1.msra.mxu0 0.0
      %321 = vmatprep.subr.mxu0 0.0
      %322 = vmatpush1.msra.mxu0 0.0
      %323 = vmatprep.subr.mxu0 0.0
      %324 = vmatpush1.msra.mxu0 0.0
      %325 = vmatprep.subr.mxu0 0.0
      %326 = vmatpush1.msra.mxu0 0.0
      %327 = vmatprep.subr.mxu0 0.0
      %328 = vmatpush1.msra.mxu0 0.0
      %329 = vmatprep.subr.mxu0 0.0
      %330 = vmatpush1.msra.mxu0 0.0
      %331 = vmatprep.subr.mxu0 0.0
      %332 = vmatpush1.msra.mxu0 0.0
      %333 = vmatprep.subr.mxu0 0.0
      %334 = vmatpush1.msra.mxu0 0.0
      %335 = vmatprep.subr.mxu0 0.0
      %336 = vmatpush1.msra.mxu0 0.0
      %337 = vmatprep.subr.mxu0 0.0
      %338 = vmatpush1.msra.mxu0 0.0
      %339 = vmatprep.subr.mxu0 0.0
      %340 = vmatpush1.msra.mxu0 0.0
      %341 = vmatprep.subr.mxu0 0.0
      %342 = vmatpush1.msra.mxu0 0.0
      %343 = vmatprep.subr.mxu0 0.0
      %344 = vmatpush1.msra.mxu0 0.0
      %345 = vmatprep.subr.mxu0 0.0
      %346 = vmatpush1.msra.mxu0 0.0
      %347 = vmatprep.subr.mxu0 0.0
      %348 = vmatpush1.msra.mxu0 0.0
      %349 = vmatprep.subr.mxu0 0.0
      %350 = vmatpush1.msra.mxu0 0.0
      %351 = vmatprep.subr.mxu0 0.0
      %352 = vmatpush1.msra.mxu0 0.0
      %353 = vmatprep.subr.mxu0 0.0
      %354 = vmatpush1.msra.mxu0 0.0
      %355 = vmatprep.subr.mxu0 0.0
      %356 = vmatpush1.msra.mxu0 0.0
      %357 = vmatprep.subr.mxu0 0.0
      %358 = vmatpush1.msra.mxu0 0.0
      %359 = vmatprep.subr.mxu0 0.0
      %360 = vmatpush1.msra.mxu0 0.0
      %361 = vmatprep.subr.mxu0 0.0
      %362 = vmatpush1.msra.mxu0 0.0
      %363 = vmatprep.subr.mxu0 0.0
      %364 = vmatpush1.msra.mxu0 0.0
      %365 = vmatprep.subr.mxu0 0.0
      %366 = vmatpush1.msra.mxu0 0.0
      %367 = vmatprep.subr.mxu0 0.0
      %368 = vmatpush1.msra.mxu0 0.0
      %369 = vmatprep.subr.mxu0 0.0
      %370 = vmatpush1.msra.mxu0 0.0
      %371 = vmatprep.subr.mxu0 0.0
      %372 = vmatpush1.msra.mxu0 0.0
      %373 = vmatprep.subr.mxu0 0.0
      %374 = vmatpush1.msra.mxu0 0.0
      %375 = vmatprep.subr.mxu0 0.0
      %376 = vmatpush1.msra.mxu0 0.0
      %377 = vmatprep.mubr.f32.mxu0 0.0
      %378 = vmatmul.mubr.f32.gmra.mrb[0].mxu0 %v262
      %v379 = vpop.f32.mrb[0].mxu0
      %v380 = vadd.f32 0.0, %v379
      %v381 = vpop.f32.mrb[0].mxu0
      %382 = vmatprep.mubr.f32.mxu0 0.0
      %383 = vmatmul.mubr.f32.gmra.mrb[0].mxu0 %v265
      %v384 = vpop.f32.mrb[0].mxu0
      %v385 = vadd.f32 0.0, %v384
      %v386 = vpop.f32.mrb[0].mxu0
      %387 = vmatprep.mubr.f32.mxu0 0.0
      %388 = vmatmul.mubr.f32.gmra.mrb[0].mxu0 %v268
      %v389 = vpop.f32.mrb[0].mxu0
      %v390 = vadd.f32 0.0, %v389
      %v391 = vpop.f32.mrb[0].mxu0
      %392 = vmatprep.mubr.f32.mxu0 0.0
      %393 = vmatmul.mubr.f32.gmra.mrb[0].mxu0 %v271
      %v394 = vpop.f32.mrb[0].mxu0
      %v395 = vadd.f32 0.0, %v394
      %v396 = vpop.f32.mrb[0].mxu0
      %397 = vmatprep.mubr.f32.mxu0 0.0
      %398 = vmatmul.mubr.f32.gmra.mrb[0].mxu0 %v274
      %v399 = vpop.f32.mrb[0].mxu0
      %v400 = vadd.f32 0.0, %v399
      %v401 = vpop.f32.mrb[0].mxu0
      %402 = vmatprep.mubr.f32.mxu0 0.0
      %403 = vmatmul.mubr.f32.gmra.mrb[0].mxu0 %v277
      %v404 = vpop.f32.mrb[0].mxu0
      %v405 = vadd.f32 0.0, %v404
      %v406 = vpop.f32.mrb[0].mxu0
      %407 = vmatprep.mubr.f32.mxu0 0.0
      %408 = vmatmul.mubr.f32.gmra.mrb[0].mxu0 %v280
      %v409 = vpop.f32.mrb[0].mxu0
      %v410 = vadd.f32 0.0, %v409
      %v411 = vpop.f32.mrb[0].mxu0
      %412 = vmatprep.mubr.f32.mxu0 0.0
      %413 = vmatmul.mubr.f32.gmra.mrb[0].mxu0 %v283
      %v414 = vpop.f32.mrb[0].mxu0
      %v415 = vadd.f32 0.0, %v414
      %v416 = vpop.f32.mrb[0].mxu0
      %417 = vmatprep.mubr.f32.mxu0 0.0
      %418 = vmatmul.mubr.f32.gmra.mrb[0].mxu0 %v286
      %v419 = vpop.f32.mrb[0].mxu0
      %v420 = vadd.f32 0.0, %v419
      %v421 = vpop.f32.mrb[0].mxu0
      %422 = vmatprep.mubr.f32.mxu0 0.0
      %423 = vmatmul.mubr.f32.gmra.mrb[0].mxu0 %v289
      %v424 = vpop.f32.mrb[0].mxu0
      %v425 = vadd.f32 0.0, %v424
      %v426 = vpop.f32.mrb[0].mxu0
      %427 = vmatprep.mubr.f32.mxu0 0.0
      %428 = vmatmul.mubr.f32.gmra.mrb[0].mxu0 %v292
      %v429 = vpop.f32.mrb[0].mxu0
      %v430 = vadd.f32 0.0, %v429
      %v431 = vpop.f32.mrb[0].mxu0
      %432 = vmatprep.mubr.f32.mxu0 0.0
      %433 = vmatmul.mubr.f32.gmra.mrb[0].mxu0 %v295
      %v434 = vpop.f32.mrb[0].mxu0
      %v435 = vadd.f32 0.0, %v434
      %v436 = vpop.f32.mrb[0].mxu0
      %437 = vmatprep.mubr.f32.mxu0 0.0
      %438 = vmatmul.mubr.f32.gmra.mrb[0].mxu0 %v298
      %v439 = vpop.f32.mrb[0].mxu0
      %v440 = vadd.f32 0.0, %v439
      %v441 = vpop.f32.mrb[0].mxu0
      %442 = vmatprep.mubr.f32.mxu0 0.0
      %443 = vmatmul.mubr.f32.gmra.mrb[0].mxu0 %v301
      %v444 = vpop.f32.mrb[0].mxu0
      %v445 = vadd.f32 0.0, %v444
      %v446 = vpop.f32.mrb[0].mxu0
      %447 = vmatprep.mubr.f32.mxu0 0.0
      %448 = vmatmul.mubr.f32.gmra.mrb[0].mxu0 %v304
      %v449 = vpop.f32.mrb[0].mxu0
      %v450 = vadd.f32 0.0, %v449
      %v451 = vpop.f32.mrb[0].mxu0
      %452 = vmatprep.mubr.f32.mxu0 0.0
      %453 = vmatmul.mubr.f32.gmra.mrb[0].mxu0 %v307
      %v454 = vpop.f32.mrb[0].mxu0
      %v455 = vadd.f32 0.0, %v454
      %v456 = vpop.f32.mrb[0].mxu0
      %457 = vdwg.mxu0
      %vm458 = vcmask 261120
      %v460 = vsel %vm458, %v223, 0
      %v463 = vsel %vm458, %v224, 0
      %v466 = vsel %vm458, %v225, 0
      %v469 = vsel %vm458, %v226, 0
      %v472 = vsel %vm458, %v227, 0
      %v475 = vsel %vm458, %v228, 0
      %v478 = vsel %vm458, %v229, 0
      %v481 = vsel %vm458, %v230, 0
      %v484 = vsel %vm458, %v231, 0
      %v487 = vsel %vm458, %v232, 0
      %v490 = vsel %vm458, %v233, 0
      %v493 = vsel %vm458, %v234, 0
      %v496 = vsel %vm458, %v235, 0
      %v499 = vsel %vm458, %v236, 0
      %v502 = vsel %vm458, %v237, 0
      %v505 = vsel %vm458, %v238, 0
      %507 = vmatprep.subr.mxu0 0.0
      %508 = vmatpush1.msra.mxu0 %v239
      %509 = vmatprep.subr.mxu0 0.0
      %510 = vmatpush1.msra.mxu0 %v240
      %511 = vmatprep.subr.mxu0 0.0
      %512 = vmatpush1.msra.mxu0 %v241
      %513 = vmatprep.subr.mxu0 0.0
      %514 = vmatpush1.msra.mxu0 %v242
      %515 = vmatprep.subr.mxu0 0.0
      %516 = vmatpush1.msra.mxu0 0.0
      %517 = vmatprep.subr.mxu0 0.0
      %518 = vmatpush1.msra.mxu0 0.0
      %519 = vmatprep.subr.mxu0 0.0
      %520 = vmatpush1.msra.mxu0 0.0
      %521 = vmatprep.subr.mxu0 0.0
      %522 = vmatpush1.msra.mxu0 0.0
      %523 = vmatprep.subr.mxu0 0.0
      %524 = vmatpush1.msra.mxu0 0.0
      %525 = vmatprep.subr.mxu0 0.0
      %526 = vmatpush1.msra.mxu0 0.0
      %527 = vmatprep.subr.mxu0 0.0
      %528 = vmatpush1.msra.mxu0 0.0
      %529 = vmatprep.subr.mxu0 0.0
      %530 = vmatpush1.msra.mxu0 0.0
      %531 = vmatprep.subr.mxu0 0.0
      %532 = vmatpush1.msra.mxu0 0.0
      %533 = vmatprep.subr.mxu0 0.0
      %534 = vmatpush1.msra.mxu0 0.0
      %535 = vmatprep.subr.mxu0 0.0
      %536 = vmatpush1.msra.mxu0 0.0
      %537 = vmatprep.subr.mxu0 0.0
      %538 = vmatpush1.msra.mxu0 0.0
      %539 = vmatprep.subr.mxu0 0.0
      %540 = vmatpush1.msra.mxu0 0.0
      %541 = vmatprep.subr.mxu0 0.0
      %542 = vmatpush1.msra.mxu0 0.0
      %543 = vmatprep.subr.mxu0 0.0
      %544 = vmatpush1.msra.mxu0 0.0
      %545 = vmatprep.subr.mxu0 0.0
      %546 = vmatpush1.msra.mxu0 0.0
      %547 = vmatprep.subr.mxu0 0.0
      %548 = vmatpush1.msra.mxu0 0.0
      %549 = vmatprep.subr.mxu0 0.0
      %550 = vmatpush1.msra.mxu0 0.0
      %551 = vmatprep.subr.mxu0 0.0
      %552 = vmatpush1.msra.mxu0 0.0
      %553 = vmatprep.subr.mxu0 0.0
      %554 = vmatpush1.msra.mxu0 0.0
      %555 = vmatprep.subr.mxu0 0.0
      %556 = vmatpush1.msra.mxu0 0.0
      %557 = vmatprep.subr.mxu0 0.0
      %558 = vmatpush1.msra.mxu0 0.0
      %559 = vmatprep.subr.mxu0 0.0
      %560 = vmatpush1.msra.mxu0 0.0
      %561 = vmatprep.subr.mxu0 0.0
      %562 = vmatpush1.msra.mxu0 0.0
      %563 = vmatprep.subr.mxu0 0.0
      %564 = vmatpush1.msra.mxu0 0.0
      %565 = vmatprep.subr.mxu0 0.0
      %566 = vmatpush1.msra.mxu0 0.0
      %567 = vmatprep.subr.mxu0 0.0
      %568 = vmatpush1.msra.mxu0 0.0
      %569 = vmatprep.subr.mxu0 0.0
      %570 = vmatpush1.msra.mxu0 0.0
      %571 = vmatprep.mubr.f32.mxu0 0.0
      %572 = vmatmul.mubr.f32.gmra.mrb[0].mxu0 %v460
      %v573 = vpop.f32.mrb[0].mxu0
      %v574 = vadd.f32 %v380, %v573
      %v575 = vpop.f32.mrb[0].mxu0
      %576 = vmatprep.mubr.f32.mxu0 0.0
      %577 = vmatmul.mubr.f32.gmra.mrb[0].mxu0 %v463
      %v578 = vpop.f32.mrb[0].mxu0
      %v579 = vadd.f32 %v385, %v578
      %v580 = vpop.f32.mrb[0].mxu0
      %581 = vmatprep.mubr.f32.mxu0 0.0
      %582 = vmatmul.mubr.f32.gmra.mrb[0].mxu0 %v466
      %v583 = vpop.f32.mrb[0].mxu0
      %v584 = vadd.f32 %v390, %v583
      %v585 = vpop.f32.mrb[0].mxu0
      %586 = vmatprep.mubr.f32.mxu0 0.0
      %587 = vmatmul.mubr.f32.gmra.mrb[0].mxu0 %v469
      %v588 = vpop.f32.mrb[0].mxu0
      %v589 = vadd.f32 %v395, %v588
      %v590 = vpop.f32.mrb[0].mxu0
      %591 = vmatprep.mubr.f32.mxu0 0.0
      %592 = vmatmul.mubr.f32.gmra.mrb[0].mxu0 %v472
      %v593 = vpop.f32.mrb[0].mxu0
      %v594 = vadd.f32 %v400, %v593
      %v595 = vpop.f32.mrb[0].mxu0
      %596 = vmatprep.mubr.f32.mxu0 0.0
      %597 = vmatmul.mubr.f32.gmra.mrb[0].mxu0 %v475
      %v598 = vpop.f32.mrb[0].mxu0
      %v599 = vadd.f32 %v405, %v598
      %v600 = vpop.f32.mrb[0].mxu0
      %601 = vmatprep.mubr.f32.mxu0 0.0
      %602 = vmatmul.mubr.f32.gmra.mrb[0].mxu0 %v478
      %v603 = vpop.f32.mrb[0].mxu0
      %v604 = vadd.f32 %v410, %v603
      %v605 = vpop.f32.mrb[0].mxu0
      %606 = vmatprep.mubr.f32.mxu0 0.0
      %607 = vmatmul.mubr.f32.gmra.mrb[0].mxu0 %v481
      %v608 = vpop.f32.mrb[0].mxu0
      %v609 = vadd.f32 %v415, %v608
      %v610 = vpop.f32.mrb[0].mxu0
      %611 = vmatprep.mubr.f32.mxu0 0.0
      %612 = vmatmul.mubr.f32.gmra.mrb[0].mxu0 %v484
      %v613 = vpop.f32.mrb[0].mxu0
      %v614 = vadd.f32 %v420, %v613
      %v615 = vpop.f32.mrb[0].mxu0
      %616 = vmatprep.mubr.f32.mxu0 0.0
      %617 = vmatmul.mubr.f32.gmra.mrb[0].mxu0 %v487
      %v618 = vpop.f32.mrb[0].mxu0
      %v619 = vadd.f32 %v425, %v618
      %v620 = vpop.f32.mrb[0].mxu0
      %621 = vmatprep.mubr.f32.mxu0 0.0
      %622 = vmatmul.mubr.f32.gmra.mrb[0].mxu0 %v490
      %v623 = vpop.f32.mrb[0].mxu0
      %v624 = vadd.f32 %v430, %v623
      %v625 = vpop.f32.mrb[0].mxu0
      %626 = vmatprep.mubr.f32.mxu0 0.0
      %627 = vmatmul.mubr.f32.gmra.mrb[0].mxu0 %v493
      %v628 = vpop.f32.mrb[0].mxu0
      %v629 = vadd.f32 %v435, %v628
      %v630 = vpop.f32.mrb[0].mxu0
      %631 = vmatprep.mubr.f32.mxu0 0.0
      %632 = vmatmul.mubr.f32.gmra.mrb[0].mxu0 %v496
      %v633 = vpop.f32.mrb[0].mxu0
      %v634 = vadd.f32 %v440, %v633
      %v635 = vpop.f32.mrb[0].mxu0
      %636 = vmatprep.mubr.f32.mxu0 0.0
      %637 = vmatmul.mubr.f32.gmra.mrb[0].mxu0 %v499
      %v638 = vpop.f32.mrb[0].mxu0
      %v639 = vadd.f32 %v445, %v638
      %v640 = vpop.f32.mrb[0].mxu0
      %641 = vmatprep.mubr.f32.mxu0 0.0
      %642 = vmatmul.mubr.f32.gmra.mrb[0].mxu0 %v502
      %v643 = vpop.f32.mrb[0].mxu0
      %v644 = vadd.f32 %v450, %v643
      %v645 = vpop.f32.mrb[0].mxu0
      %646 = vmatprep.mubr.f32.mxu0 0.0
      %647 = vmatmul.mubr.f32.gmra.mrb[0].mxu0 %v505
      %v648 = vpop.f32.mrb[0].mxu0
      %v649 = vadd.f32 %v455, %v648
      %v650 = vpop.f32.mrb[0].mxu0
      %651 = vdwg.mxu0
      %652 = vst.msk [vmem:[%s221] sm:$0xff] %vm458, %v574
      %653 = vst.msk [vmem:[%s221 + $0x8] sm:$0xff] %vm458, %v579
      %654 = vst.msk [vmem:[%s221 + $0x10] sm:$0xff] %vm458, %v584
      %655 = vst.msk [vmem:[%s221 + $0x18] sm:$0xff] %vm458, %v589
      %656 = vst.msk [vmem:[%s221 + $0x20] sm:$0xff] %vm458, %v594
      %657 = vst.msk [vmem:[%s221 + $0x28] sm:$0xff] %vm458, %v599
      %658 = vst.msk [vmem:[%s221 + $0x30] sm:$0xff] %vm458, %v604
      %659 = vst.msk [vmem:[%s221 + $0x38] sm:$0xff] %vm458, %v609
      %660 = vst.msk [vmem:[%s221 + $0x40] sm:$0xff] %vm458, %v614
      %661 = vst.msk [vmem:[%s221 + $0x48] sm:$0xff] %vm458, %v619
      %662 = vst.msk [vmem:[%s221 + $0x50] sm:$0xff] %vm458, %v624
      %663 = vst.msk [vmem:[%s221 + $0x58] sm:$0xff] %vm458, %v629
      %664 = vst.msk [vmem:[%s221 + $0x60] sm:$0xff] %vm458, %v634
      %665 = vst.msk [vmem:[%s221 + $0x68] sm:$0xff] %vm458, %v639
      %666 = vst.msk [vmem:[%s221 + $0x70] sm:$0xff] %vm458, %v644
      %667 = vst.msk [vmem:[%s221 + $0x78] sm:$0xff] %vm458, %v649
      %s668 = smul.u32 16, %s15
      %p669 = scmp.lt.s32.totalorder %s668, 31
      %s670 = scalar_select %p669, %s668, 31
      %s671 = smul.addr %s670, 8
      %s672 = scalar_lea.vmem %s4, %s671
      // Predicated region
      $region37: #{koopman_forward.1} parent=35 // pred_check
        %p673 = pneg %p127
      $region38: #{koopman_forward.1} parent=35 // pred_check_branch
        %675 = sbr.rel (%p673) target = $region40
      $region39: #{koopman_forward.1} parent=35 // pred_region
        %s676 = smul.u32 16, %s15
      $region40: #{koopman_forward.1} parent=35 // pred_fallthru
        _
    $region36: #{koopman_forward.1} parent=5 // pred_fallthru
      _
    %p677 = scmp.le.s32.totalorder 2, %s10
    // Predicated region
    $region41: #{koopman_forward.1} parent=5 // pred_check
      %p678 = pneg %p677
    $region42: #{koopman_forward.1} parent=5 // pred_check_branch
      %680 = sbr.rel (%p678) target = $region44
    $region43: #{koopman_forward.1} parent=5 // pred_region
      %s681 = ssub.s32 %s10, 2
      // Predicated region
      $region45: #{koopman_forward.1} parent=43 // pred_check
        %p682 = pneg %p133
      $region46: #{koopman_forward.1} parent=43 // pred_check_branch
        %684 = sbr.rel (%p682) target = $region48
      $region47: #{koopman_forward.1} parent=43 // pred_region
        %s685 = smul.u32 16, %s16
        %p686 = scmp.lt.s32.totalorder %s685, 31
        %s687 = scalar_select %p686, %s685, 31
        %s688 = smul.addr %s687, 8
        %s689 = scalar_lea.vmem %s4, %s688
      $region48: #{koopman_forward.1} parent=43 // pred_fallthru
        _
    $region44: #{koopman_forward.1} parent=5 // pred_fallthru
      _
  $region6: #{koopman_forward.1} parent=0 // loop_footer
    %s14 = sadd.s32 1, %s10
  $region7: #{koopman_forward.1} parent=0 // loop_footer_branch
    %9 = sbr.rel target = $region3
  $region8: #{koopman_forward.1} parent=0 // loop_exit
    _

</llo_original>
